<compile_context>
chip_gen: v7x
topology: tpu7x:2x2x1
jax: 0.10.0
libtpu: 0.0.40
codegen_flags: <defaults>
</compile_context>

<pallas_src>
import jax
import jax.numpy as jnp
from jax.experimental import pallas as pl
from jax.experimental.pallas import tpu as pltpu


def _round_up(x: int, m: int) -> int:
    return (x + m - 1) // m * m


def _heads_cil_kernel(x_ref, w_ref, b_ref, o_ref):
    # x: [Bp, D] (resident across the grid), w: [D, TC], b: [1, TC] -> o: [Bp, TC]
    o_ref[...] = (
        jnp.dot(x_ref[...], w_ref[...], preferred_element_type=jnp.float32)
        + b_ref[...]
    ).astype(o_ref.dtype)


def _heads_cil_matmul(feature, w_pad, b_pad, tc: int):
    """feature: [Bp, D] (Bp % 8 == 0), w_pad: [D, Cp] (Cp % tc == 0), b_pad: [1, Cp]."""
    Bp, D = feature.shape
    Cp = w_pad.shape[1]
    grid = (Cp // tc,)
    cost = pl.CostEstimate(
        flops=2 * Bp * D * Cp,
        bytes_accessed=(
            feature.size * feature.dtype.itemsize
            + w_pad.size * w_pad.dtype.itemsize
            + b_pad.size * 4
            + Bp * Cp * 4
        ),
        transcendentals=0,
    )
    return pl.pallas_call(
        _heads_cil_kernel,
        out_shape=jax.ShapeDtypeStruct((Bp, Cp), jnp.float32),
        grid_spec=pltpu.PrefetchScalarGridSpec(
            num_scalar_prefetch=0,
            grid=grid,
            in_specs=[
                pl.BlockSpec((Bp, D), lambda j: (0, 0)),  # feature: single resident block
                pl.BlockSpec((D, tc), lambda j: (0, j)),  # stream W class-tiles (double-buffered)
                pl.BlockSpec((1, tc), lambda j: (0, j)),  # stream bias tiles
            ],
            out_specs=pl.BlockSpec((Bp, tc), lambda j: (0, j)),
        ),
        compiler_params=pltpu.CompilerParams(
            dimension_semantics=("parallel",),      # shard class tiles across v7x's 2 TCs
            vmem_limit_bytes=32 * 1024 * 1024,      # fits v5e/v6e/v7x scoped VMEM budgets
        ),
        cost_estimate=cost,
    )(feature, w_pad, b_pad)


class HeadsCIL:
    """JAX/Pallas re-implementation of the CIL output heads.

    Heads are stored per task (keyed by task_id). forward() computes the
    concatenated logits of all heads 1..task_id as a single fused
    matmul+bias Pallas kernel, streaming class-axis tiles of the cached,
    lane-padded concatenated weight matrix.
    """

    _TC = 512       # class-axis tile (multiple of 128 lanes, f32 out tile = Bp*512*4 B)
    _LANE = 128
    _SUBLANE = 8

    def __init__(self, input_dim: int, weight_dtype=jnp.bfloat16) -> None:
        self.input_dim = input_dim
        self.weight_dtype = weight_dtype
        self.heads: dict[int, tuple[jnp.ndarray, jnp.ndarray]] = {}
        self.task_id: int | None = None
        # task_id -> (w_pad [D, Cp] weight_dtype, b_pad [1, Cp] f32, C_total, tc)
        self._cat_cache: dict[int, tuple] = {}

    def setup_task_id(self, task_id: int, num_classes_t: int) -> None:
        self.task_id = task_id
        if task_id not in self.heads:
            # Deterministic synthetic init (mimics nn.Linear's uniform fan-in bound).
            key = jax.random.PRNGKey(1000 + task_id)
            kw, kb = jax.random.split(key)
            bound = 1.0 / float(self.input_dim) ** 0.5
            w = jax.random.uniform(
                kw, (self.input_dim, num_classes_t), jnp.float32, -bound, bound
            )
            b = jax.random.uniform(kb, (num_classes_t,), jnp.float32, -bound, bound)
            # Weights cached in bf16 (halves HBM traffic of the dominant W read);
            # bias stays f32.
            self.heads[task_id] = (w.astype(self.weight_dtype), b.astype(jnp.float32))
            # Adding a head invalidates any cached concatenations.
            self._cat_cache.clear()

    def _get_cat(self):
        """Cached, lane-padded concat of head params for tasks 1..task_id."""
        tid = self.task_id
        cached = self._cat_cache.get(tid)
        if cached is not None:
            return cached
        ws = [self.heads[t][0] for t in range(1, tid + 1)]
        bs = [self.heads[t][1] for t in range(1, tid + 1)]
        w_cat = jnp.concatenate(ws, axis=-1)            # [D, C_total]
        b_cat = jnp.concatenate(bs, axis=-1)            # [C_total]
        c_total = w_cat.shape[1]
        tc = min(self._TC, _round_up(c_total, self._LANE))
        c_pad = _round_up(c_total, tc)
        if c_pad != c_total:
            # Padded bias/weight columns are zero; the padded logits are sliced
            # off before returning so they never leak to argmax/softmax.
            w_cat = jnp.pad(w_cat, ((0, 0), (0, c_pad - c_total)))
            b_cat = jnp.pad(b_cat, (0, c_pad - c_total))
        entry = (w_cat, b_cat[None, :], c_total, tc)
        self._cat_cache[tid] = entry
        return entry

    def forward(self, feature: jnp.ndarray, task_id: int | None = None) -> jnp.ndarray:
        # task_id arg is a CIL placeholder: all heads 1..self.task_id are used.
        assert self.task_id is not None, "call setup_task_id() first"
        w_pad, b_pad, c_total, tc = self._get_cat()

        B, D = feature.shape
        assert D == self.input_dim
        # Pad batch to the f32 sublane (8); feature stays in its native dtype.
        b_padded = _round_up(max(B, 1), self._SUBLANE)
        x = feature if b_padded == B else jnp.pad(feature, ((0, b_padded - B), (0, 0)))

        logits_pad = _heads_cil_matmul(x, w_pad, b_pad, tc)   # [Bp, Cp] f32
        return logits_pad[:B, :c_total]

    __call__ = forward


if __name__ == "__main__":
    B, D = 2, 32
    heads = HeadsCIL(input_dim=D)
    # Simulate a 3-task CIL loop with different class counts per task.
    heads.setup_task_id(1, 3)
    heads.setup_task_id(2, 4)
    heads.setup_task_id(3, 5)

    feature = jax.random.normal(jax.random.PRNGKey(0), (B, D), jnp.float32)

    logits = heads(feature)
    jax.block_until_ready(logits)

    # Reference: plain-JAX concat-of-linears using the same (bf16) cached weights.
    ref = jnp.concatenate(
        [
            feature @ heads.heads[t][0].astype(jnp.float32) + heads.heads[t][1]
            for t in range(1, 4)
        ],
        axis=-1,
    )
    assert logits.shape == (B, 3 + 4 + 5), logits.shape
    assert jnp.allclose(logits, ref, atol=1e-2, rtol=1e-2), (
        float(jnp.max(jnp.abs(logits - ref)))
    )
    print("KERNEL_OK")
</pallas_src>

<mosaic_0001>
module attributes {stable_mosaic.version = 11 : i64} {
  func.func @_heads_cil_kernel(%arg0: i32, %arg1: memref<8x32xf32, #tpu.memory_space<vmem>>, %arg2: memref<32x128xbf16, #tpu.memory_space<vmem>>, %arg3: memref<1x128xf32, #tpu.memory_space<vmem>>, %arg4: memref<8x128xf32, #tpu.memory_space<vmem>>) attributes {dimension_semantics = [#tpu.dimension_semantics<parallel>], iteration_bounds = array<i64: 1>, scalar_prefetch = 0 : i64, scratch_operands = 0 : i64, tpu.core_type = #tpu.core_type<tc>, window_params = [{pipeline_mode = #tpu.pipeline_mode<synchronous>, transform_indices = @transform_0, window_bounds = array<i64: 8, 32>}, {transform_indices = @transform_1, window_bounds = array<i64: 32, 128>}, {transform_indices = @transform_2, window_bounds = array<i64: 1, 128>}, {transform_indices = @transform_3, window_bounds = array<i64: 8, 128>}]} {
    %c0 = arith.constant 0 : index
    %c0_0 = arith.constant 0 : index
    %0 = vector.load %arg1[%c0, %c0_0] : memref<8x32xf32, #tpu.memory_space<vmem>>, vector<8x32xf32>
    %c0_1 = arith.constant 0 : index
    %c0_2 = arith.constant 0 : index
    %1 = vector.load %arg2[%c0_1, %c0_2] : memref<32x128xbf16, #tpu.memory_space<vmem>>, vector<32x128xbf16>
    %cst = arith.constant dense<0.000000e+00> : vector<8x128xf32>
    %2 = tpu.matmul %0, %1, %cst {dimension_numbers = #tpu.dot_dimension_numbers<[1], [0], [0], [1], [0, 0, 1, 1], [], []>} : vector<8x32xf32>, vector<32x128xbf16>, vector<8x128xf32> -> vector<8x128xf32>
    %c0_3 = arith.constant 0 : index
    %c0_4 = arith.constant 0 : index
    %3 = vector.load %arg3[%c0_3, %c0_4] : memref<1x128xf32, #tpu.memory_space<vmem>>, vector<1x128xf32>
    %4 = vector.broadcast %3 : vector<1x128xf32> to vector<8x128xf32>
    %5 = arith.addf %2, %4 : vector<8x128xf32>
    %c0_5 = arith.constant 0 : index
    %c0_6 = arith.constant 0 : index
    %6 = vector.load %arg4[%c0_5, %c0_6] : memref<8x128xf32, #tpu.memory_space<vmem>>, vector<8x128xf32>
    tpu.vector_store %arg4[%c0_5, %c0_6], %5 {strides = array<i32>} : memref<8x128xf32, #tpu.memory_space<vmem>>, vector<8x128xf32>,
    return
  }
  func.func @transform_0(%arg0: i32) -> (i32, i32) {
    %c0_i32 = arith.constant 0 : i32
    %c0_i32_0 = arith.constant 0 : i32
    %c0_i32_1 = arith.constant 0 : i32
    return %c0_i32, %c0_i32_0 : i32, i32
  }
  func.func @transform_1(%arg0: i32) -> (i32, i32) {
    %c0_i32 = arith.constant 0 : i32
    %c0_i32_0 = arith.constant 0 : i32
    return %c0_i32, %arg0 : i32, i32
  }
  func.func @transform_2(%arg0: i32) -> (i32, i32) {
    %c0_i32 = arith.constant 0 : i32
    %c0_i32_0 = arith.constant 0 : i32
    return %c0_i32, %arg0 : i32, i32
  }
  func.func @transform_3(%arg0: i32) -> (i32, i32) {
    %c0_i32 = arith.constant 0 : i32
    %c0_i32_0 = arith.constant 0 : i32
    return %c0_i32, %arg0 : i32, i32
  }
}

</mosaic_0001>

<llo_original>
// kernel: tpu_custom_call.1
$region0: #{tpu_custom_call.1}
  #allocation0 [shape = 'u32[]', space=smem, size = 0x4, offset = 0x4, fixed_abs, tag = 'smem constant byte address 0x4 - core index']
  #allocation1 [shape = 'u32[144,128]{1,0:T(1,128)}', space=vmem, size = 0x12000, scoped, tag = 'internal scratch']
  %s0 = inlined_call_operand.hbm [shape: f32[8,32], index: 0, kind: input, shape index: {}]
  %s1 = inlined_call_operand.hbm [shape: bf16[32,128], index: 1, kind: input, shape index: {}]
  %s2 = inlined_call_operand.vmem [shape: f32[1,128], index: 2, kind: input, shape index: {}]
  %s3 = inlined_call_operand.hbm [shape: f32[8,128], index: 3, kind: output, shape index: {}]
  %s4 = sld [smem:[#allocation0]]
  $region30: #{tpu_custom_call.1} parent=0
    _
  %s6 = ssub.s32 1, %s4
  %s7 = scalar_select 0, %s6, %s4
  $region1: #{tpu_custom_call.1} parent=0
    #allocation2 [shape = 'u8[4096]{0}', space=vmem, size = 0x1000, scoped, tag = 'input window, operand 0, single buffered']
    #allocation3 [shape = 's32[1]{0}', space=sflag, size = 0x4, scoped, tag = 'scoped memory for tpu_custom_call.1']
    #allocation4 [shape = 's32[1]{0}', space=sflag, size = 0x4, scoped, tag = 'scoped memory for tpu_custom_call.1']
    #allocation5 [shape = 'u8[8192]{0}', space=vmem, size = 0x2000, scoped, tag = 'input window, operand 1, single buffered']
    #allocation6 [shape = 's32[1]{0}', space=sflag, size = 0x4, scoped, tag = 'scoped memory for tpu_custom_call.1']
    #allocation7 [shape = 'u8[4096]{0}', space=vmem, size = 0x1000, scoped, tag = 'output window, operand 0, single buffered']
    %8 = vsyncpa [#allocation3], 0
    %9 = vsyncpa [#allocation6], 0
    %10 = vsyncpa [#allocation4], 0
    // Predicated region
    $region2: #{tpu_custom_call.1} parent=1 // pred_check
      _
    $region3: #{tpu_custom_call.1} parent=1 // pred_check_branch
      %12 = sbr.rel (0) target = $region5
    $region4: #{tpu_custom_call.1} parent=1 // pred_region
      %s14 = ssub.s32 128, 128
      %15 = vsyncadd [#allocation3], %s14
      %s17 = sshll.u32 [#allocation2], 4
      %s18 = int_to_ptr.vmem [resolvable:$true] %s17
      %20 = dma.hbm_to_vmem [thread:$0]  %s0, 128, %s18, [#allocation3]
    $region5: #{tpu_custom_call.1} parent=1 // pred_fallthru
      _
    // Predicated region
    $region6: #{tpu_custom_call.1} parent=1 // pred_check
      _
    $region7: #{tpu_custom_call.1} parent=1 // pred_check_branch
      %22 = sbr.rel (0) target = $region9
    $region8: #{tpu_custom_call.1} parent=1 // pred_region
      %s24 = ssub.s32 256, 256
      %25 = vsyncadd [#allocation6], %s24
      %s26 = sshll.u32 [#allocation5], 4
      %s27 = int_to_ptr.vmem [resolvable:$true] %s26
      %32 = dma.hbm_to_vmem [thread:$0]  %s1, 256, %s27, [#allocation6], 64, 64, 4
    $region9: #{tpu_custom_call.1} parent=1 // pred_fallthru
      _
    // Predicated region
    $region10: #{tpu_custom_call.1} parent=1 // pred_check
      _
    $region11: #{tpu_custom_call.1} parent=1 // pred_check_branch
      %34 = sbr.rel (0) target = $region13
    $region12: #{tpu_custom_call.1} parent=1 // pred_region
      _
    $region13: #{tpu_custom_call.1} parent=1 // pred_fallthru
      _
    // Predicated region
    $region14: #{tpu_custom_call.1} parent=1 // pred_check
      _
    $region15: #{tpu_custom_call.1} parent=1 // pred_check_branch
      %36 = sbr.rel (0) target = $region17
    $region16: #{tpu_custom_call.1} parent=1 // pred_region
      %37 = dma.done [#allocation3], 128
    $region17: #{tpu_custom_call.1} parent=1 // pred_fallthru
      _
    // Predicated region
    $region18: #{tpu_custom_call.1} parent=1 // pred_check
      _
    $region19: #{tpu_custom_call.1} parent=1 // pred_check_branch
      %39 = sbr.rel (0) target = $region21
    $region20: #{tpu_custom_call.1} parent=1 // pred_region
      %40 = dma.done [#allocation6], 256
    $region21: #{tpu_custom_call.1} parent=1 // pred_fallthru
      _
    %v42 = vld [vmem:[#allocation2] sm:$0xff]
    %v43 = vld [vmem:[#allocation5] sm:$0xf]
    %v44 = vld [vmem:[#allocation5 + $0x4] sm:$0xf]
    %v45 = vld [vmem:[#allocation5 + $0x8] sm:$0xf]
    %v46 = vld [vmem:[#allocation5 + $0xc] sm:$0xf]
    %v47 = vld [vmem:[%s2] sm:$0x1]
    %v49 = vlaneseq
    %v50 = vshrl.u32 %v49, 7
    %v51 = vsub.s32 0, %v50
    %v52 = vrot.slane %v47, %v51
    %v58 = vunpack.c.l.b16 %v43
    %v59 = vunpack.c.l.b16 %v44
    %v60 = vunpack.c.l.b16 %v45
    %v61 = vunpack.c.l.b16 %v46
    %v62 = vpack.c.b16 %v59, %v58
    %v63 = vpack.c.b16 %v61, %v60
    %vm66 = vcmask 261120
    %v68 = vsel %vm66, %v42, 0
    %70 = vmatprep.subr.bf16.mxu0 0
    %71 = vmatpush1.bf16.msra.mxu0 %v62
    %72 = vmatprep.subr.bf16.mxu0 0
    %73 = vmatpush1.bf16.msra.mxu0 %v63
    %74 = vmatprep.subr.bf16.mxu0 0
    %75 = vmatpush1.bf16.msra.mxu0 0
    %76 = vmatprep.subr.bf16.mxu0 0
    %77 = vmatpush1.bf16.msra.mxu0 0
    %78 = vmatprep.subr.bf16.mxu0 0
    %79 = vmatpush1.bf16.msra.mxu0 0
    %80 = vmatprep.subr.bf16.mxu0 0
    %81 = vmatpush1.bf16.msra.mxu0 0
    %82 = vmatprep.subr.bf16.mxu0 0
    %83 = vmatpush1.bf16.msra.mxu0 0
    %84 = vmatprep.subr.bf16.mxu0 0
    %85 = vmatpush1.bf16.msra.mxu0 0
    %86 = vmatprep.subr.bf16.mxu0 0
    %87 = vmatpush1.bf16.msra.mxu0 0
    %88 = vmatprep.subr.bf16.mxu0 0
    %89 = vmatpush1.bf16.msra.mxu0 0
    %90 = vmatprep.subr.bf16.mxu0 0
    %91 = vmatpush1.bf16.msra.mxu0 0
    %92 = vmatprep.subr.bf16.mxu0 0
    %93 = vmatpush1.bf16.msra.mxu0 0
    %94 = vmatprep.subr.bf16.mxu0 0
    %95 = vmatpush1.bf16.msra.mxu0 0
    %96 = vmatprep.subr.bf16.mxu0 0
    %97 = vmatpush1.bf16.msra.mxu0 0
    %98 = vmatprep.subr.bf16.mxu0 0
    %99 = vmatpush1.bf16.msra.mxu0 0
    %100 = vmatprep.subr.bf16.mxu0 0
    %101 = vmatpush1.bf16.msra.mxu0 0
    %102 = vmatprep.mubr.f32.mxu0 0.0
    %103 = vmatmul.mubr.f32.gmra.mrb[0].mxu0 %v68
    %v104 = vpop.f32.mrb[0].mxu0
    %v105 = vadd.f32 %v52, %v104
    %v106 = vpop.f32.mrb[0].mxu0
    %107 = vdwg.mxu0
    %108 = vst [vmem:[#allocation7] sm:$0xff] %v105
    // Predicated region
    $region22: #{tpu_custom_call.1} parent=1 // pred_check
      _
    $region23: #{tpu_custom_call.1} parent=1 // pred_check_branch
      %110 = sbr.rel (0) target = $region25
    $region24: #{tpu_custom_call.1} parent=1 // pred_region
      %s112 = ssub.s32 128, 128
      %113 = vsyncadd [#allocation4], %s112
      %s115 = sshll.u32 [#allocation7], 4
      %s116 = int_to_ptr.vmem [resolvable:$true] %s115
      %118 = dma.vmem_to_hbm [thread:$0]  %s116, 128, %s3, [#allocation4]
    $region25: #{tpu_custom_call.1} parent=1 // pred_fallthru
      _
    // Predicated region
    $region26: #{tpu_custom_call.1} parent=1 // pred_check
      _
    $region27: #{tpu_custom_call.1} parent=1 // pred_check_branch
      %120 = sbr.rel (0) target = $region29
    $region28: #{tpu_custom_call.1} parent=1 // pred_region
      %121 = dma.done [#allocation4], 128
    $region29: #{tpu_custom_call.1} parent=1 // pred_fallthru
      _
    %122 = vsyncpa [#allocation3], 1
    %123 = vsyncpa [#allocation6], 1
    %124 = vsyncpa [#allocation4], 1

</llo_original>
